<compile_context>
chip_gen: v7x
topology: tpu7x:2x2x1
jax: 0.10.0
libtpu: 0.0.40
codegen_flags: <defaults>
</compile_context>

<pallas_src>
import functools

import jax
import jax.numpy as jnp
from jax import lax
from jax.experimental import pallas as pl
from jax.experimental.pallas import tpu as pltpu


def _round_up(x, m):
    return ((x + m - 1) // m) * m


def _denoise_loss_kernel(qn_ref, kn_ref, mask_ref, lsum_ref, bias_ref, o_ref,
                         m_sc, s_sc, ls_sc, *, mask_cols):
    j = pl.program_id(1)

    @pl.when(j == 0)
    def _():
        m_sc[...] = jnp.full_like(m_sc, -jnp.inf)
        s_sc[...] = jnp.zeros_like(s_sc)
        ls_sc[...] = jnp.zeros_like(ls_sc)

    qn = qn_ref[...]       # (TM, Dp) bf16: L2-normalized rows * (1/temperature)
    kn = kn_ref[...]       # (TN, Dp) bf16: L2-normalized rows
    L = mask_ref[...]      # (TM, TN) bf16: (denoised) positive-pair mask

    # sim_ij = <qn_i, kn_j>  -- bf16 x bf16 MXU matmul, f32 accumulation.
    sim = lax.dot_general(qn, kn, (((1,), (1,)), ((), ())),
                          preferred_element_type=jnp.float32)   # (TM, TN) f32
    if mask_cols:
        # 0 / -1e30 bias row masks padded key columns (f32, so no overflow).
        sim = sim + bias_ref[...]

    # Online log-sum-exp over the key axis (only N^2 exp, no N^2 log/div).
    m_prev = m_sc[...]
    m_new = jnp.maximum(m_prev, jnp.max(sim, axis=1, keepdims=True))
    alpha = jnp.exp(m_prev - m_new)
    s_sc[...] = alpha * s_sc[...] + jnp.sum(jnp.exp(sim - m_new),
                                            axis=1, keepdims=True)
    m_sc[...] = m_new

    # sum_j L_ij * sim_ij  ==  sum_d qn_id * (L @ kn)_id   (second MXU matmul).
    lk = lax.dot_general(L, kn, (((1,), (0,)), ((), ())),
                         preferred_element_type=jnp.float32)    # (TM, Dp) f32
    ls_sc[...] += jnp.sum(qn.astype(jnp.float32) * lk, axis=1, keepdims=True)

    @pl.when(j == pl.num_programs(1) - 1)
    def _():
        lse = m_sc[...] + jnp.log(s_sc[...])                    # (TM, 1)
        lsum = lsum_ref[...]                                    # (TM, 1)
        denom = jnp.maximum(lsum, 1e-7)
        # sum_j Ln_ij * (-logp_ij) = (lse_i * sum_j L_ij - sum_j L_ij sim_ij)/denom_i
        contrib = (lse * lsum - ls_sc[...]) / denom
        total = jnp.sum(contrib).astype(jnp.float32)
        # Lane-dense (8,128) output block holding the per-row-tile partial sum.
        o_ref[...] = jnp.broadcast_to(total, o_ref.shape)


def _denoise_contrastive_loss_pallas(x_q, x_k, L, temperature, tm=None, tn=None):
    N, D = x_q.shape
    Dp = _round_up(D, 128)
    inv_temp = float(1.0 / temperature)

    # ---- one-time O(N*D) preprocessing, fused with the padding copies ----
    # F.normalize rows: x / max(||x||, 1e-12) == x * rsqrt(max(||x||^2, 1e-24));
    # 1/temperature folded into the q scale.  Cast to bf16 for the MXU + to
    # halve the q/k HBM streams.
    xq32 = x_q.astype(jnp.float32)
    xk32 = x_k.astype(jnp.float32)
    q_scale = lax.rsqrt(jnp.maximum(
        jnp.sum(xq32 * xq32, axis=1, keepdims=True), 1e-24)) * inv_temp
    k_scale = lax.rsqrt(jnp.maximum(
        jnp.sum(xk32 * xk32, axis=1, keepdims=True), 1e-24))
    qn = (xq32 * q_scale).astype(jnp.bfloat16)
    kn = (xk32 * k_scale).astype(jnp.bfloat16)

    # ---- tile selection ----
    if tm is None:
        TM = min(512, _round_up(N, 8))
        n_qt = -(-N // TM)
        if n_qt > 1 and n_qt % 2 == 1:
            # v7x megacore: keep the "parallel" query-tile axis even.
            alt = _round_up(-(-N // (n_qt + 1)), 8)
            if (-(-N // alt)) % 2 == 0:
                TM = alt
    else:
        TM = _round_up(tm, 8)
    TN = min(1024, _round_up(N, 128)) if tn is None else _round_up(tn, 128)

    def _vmem_need(tm_, tn_):
        # double-buffered inputs/outputs (bf16 q/k/mask, f32 lsum/bias/out)
        # + f32 accumulator scratches.
        return (2 * (tm_ * Dp * 2 + tn_ * Dp * 2 + tm_ * tn_ * 2
                     + tm_ * 4 + tn_ * 4 + 8 * 128 * 4) + 3 * tm_ * 4)

    # Keep well under v5e's tighter scoped-VMEM budget; shrink TN then TM.
    budget = 28 * (1 << 20)
    while _vmem_need(TM, TN) > budget and TN > 128:
        TN = max(128, ((TN // 2) // 128) * 128)
    while _vmem_need(TM, TN) > budget and TM > 8:
        TM = max(8, ((TM // 2) // 8) * 8)

    N_m = _round_up(N, TM)
    N_n = _round_up(N, TN)
    grid = (N_m // TM, N_n // TN)
    mask_cols = (N_n != N)

    # ---- padded operands ----
    # Zero-padded q/k rows stay zero after normalization; padded key columns
    # are masked by the bias row; padded mask entries are zero.
    qn_p = jnp.zeros((N_m, Dp), jnp.bfloat16).at[:N, :D].set(qn)
    kn_p = jnp.zeros((N_n, Dp), jnp.bfloat16).at[:N, :D].set(kn)
    L32 = L.astype(jnp.float32)
    L_p = jnp.zeros((N_m, N_n), jnp.bfloat16).at[:N, :N].set(
        L32.astype(jnp.bfloat16))
    lsum_p = jnp.zeros((N_m, 1), jnp.float32).at[:N, :].set(
        jnp.sum(L32, axis=1, keepdims=True))
    bias_p = jnp.where(jnp.arange(N_n)[None, :] < N,
                       0.0, -1e30).astype(jnp.float32)          # (1, N_n)

    kernel = functools.partial(_denoise_loss_kernel, mask_cols=mask_cols)

    cost = pl.CostEstimate(
        flops=4 * N_m * N_n * Dp,                      # sim matmul + L @ kn
        transcendentals=N_m * N_n + N_m * grid[1] + N_m,
        bytes_accessed=(N_m * Dp * 2                   # qn (resident over j)
                        + grid[0] * N_n * Dp * 2       # kn re-fetched per q-tile
                        + N_m * N_n * 2                # bf16 mask stream
                        + N_m * 4 + grid[0] * N_n * 4  # lsum + bias
                        + grid[0] * 8 * 128 * 4))      # partial-sum output

    cparams = dict(dimension_semantics=("parallel", "arbitrary"))
    need = _vmem_need(TM, TN)
    if need > 12 * (1 << 20):
        # v5e default scoped VMEM is 16 MiB; raise explicitly when tiles grow.
        cparams["vmem_limit_bytes"] = min(int(need * 1.5), 48 * (1 << 20))

    partials = pl.pallas_call(
        kernel,
        out_shape=jax.ShapeDtypeStruct((grid[0], 8, 128), jnp.float32),
        grid_spec=pltpu.PrefetchScalarGridSpec(
            num_scalar_prefetch=0,
            grid=grid,
            in_specs=[
                pl.BlockSpec((TM, Dp), lambda i, j: (i, 0)),   # qn
                pl.BlockSpec((TN, Dp), lambda i, j: (j, 0)),   # kn
                pl.BlockSpec((TM, TN), lambda i, j: (i, j)),   # mask (bf16)
                pl.BlockSpec((TM, 1), lambda i, j: (i, 0)),    # row sums of L
                pl.BlockSpec((1, TN), lambda i, j: (0, j)),    # pad-col bias
            ],
            out_specs=pl.BlockSpec((1, 8, 128), lambda i, j: (i, 0, 0)),
            scratch_shapes=[
                pltpu.VMEM((TM, 1), jnp.float32),   # running max
                pltpu.VMEM((TM, 1), jnp.float32),   # running sum-exp
                pltpu.VMEM((TM, 1), jnp.float32),   # sum_j L_ij * sim_ij
            ],
        ),
        compiler_params=pltpu.CompilerParams(**cparams),
        cost_estimate=cost,
    )(qn_p, kn_p, L_p, lsum_p, bias_p)

    return jnp.sum(partials[:, 0, 0]) / jnp.float32(N * N)


def _svd_denoise_mask(mask_pos, association, singular_thresh):
    """Optional SVD low-rank denoising of the positive mask (plain JAX glue)."""
    enable = association[0] != association[1]
    # TODO(synk): jnp.linalg.svd has no Pallas equivalent; kept outside kernel.
    U, S, Vh = jnp.linalg.svd(mask_pos, full_matrices=False)
    S_clipped = jnp.where(S < singular_thresh, 0.0, S)
    L_denoised = (U * S_clipped[None, :]) @ Vh
    return jnp.where(enable, L_denoised, mask_pos)


class DenoiseContrastiveLoss:
    def __init__(self, temperature):
        self.temperature = float(temperature)

    def __call__(self, x_q, x_k, mask_pos=None, singular_thresh=0.2,
                 association=None):
        N = x_q.shape[0]
        if mask_pos is None:
            mask_pos = jnp.eye(N, dtype=jnp.float32)
        if association is None:
            association = jnp.array([0, 0], dtype=jnp.int32)
        L = _svd_denoise_mask(mask_pos.astype(jnp.float32),
                              jnp.asarray(association),
                              float(singular_thresh))
        return _denoise_contrastive_loss_pallas(x_q, x_k, L, self.temperature)


def _reference_loss(x_q, x_k, L, temperature):
    """Pure-JAX f32 reference matching the PyTorch forward (for verification)."""
    qn = x_q / jnp.maximum(jnp.linalg.norm(x_q, axis=1, keepdims=True), 1e-12)
    kn = x_k / jnp.maximum(jnp.linalg.norm(x_k, axis=1, keepdims=True), 1e-12)
    sim = (qn @ kn.T) / temperature
    logp = -jax.nn.log_softmax(sim, axis=1)
    Ln = L / jnp.maximum(jnp.sum(L, axis=1, keepdims=True), 1e-7)
    return jnp.mean(Ln * logp)


if __name__ == "__main__":
    key = jax.random.PRNGKey(0)
    k1, k2, k3 = jax.random.split(key, 3)

    # bf16 MXU path vs f32 reference -> use a 2e-2 tolerance (loss ~O(0.1-1)).
    RTOL = ATOL = 2e-2

    N, D = 8, 32
    x_q = jax.random.normal(k1, (N, D), dtype=jnp.float32)
    x_k = jax.random.normal(k2, (N, D), dtype=jnp.float32)
    # Non-trivial non-negative positive-pair mask to exercise the SVD path.
    mask_pos = jnp.eye(N, dtype=jnp.float32) + 0.3 * jax.random.uniform(
        k3, (N, N), dtype=jnp.float32)
    association = jnp.array([0, 1], dtype=jnp.int32)   # unequal -> denoise on

    loss_fn = DenoiseContrastiveLoss(temperature=0.07)
    loss = loss_fn(x_q, x_k, mask_pos=mask_pos, singular_thresh=0.2,
                   association=association)
    jax.block_until_ready(loss)

    L_ref = _svd_denoise_mask(mask_pos, association, 0.2)
    ref = _reference_loss(x_q, x_k, L_ref, 0.07)
    assert jnp.allclose(loss, ref, rtol=RTOL, atol=ATOL), (loss, ref)

    # Default path: identity mask, denoise disabled.
    loss2 = loss_fn(x_q, x_k)
    jax.block_until_ready(loss2)
    ref2 = _reference_loss(x_q, x_k, jnp.eye(N, dtype=jnp.float32), 0.07)
    assert jnp.allclose(loss2, ref2, rtol=RTOL, atol=ATOL), (loss2, ref2)

    # Multi-tile + padded path: forces a 2x2 grid (padded rows, padded key
    # columns via the bias row, multi-step online LSE) with small tiles.
    N2, D2 = 200, 96
    k4, k5, k6 = jax.random.split(jax.random.PRNGKey(1), 3)
    xq2 = jax.random.normal(k4, (N2, D2), dtype=jnp.float32)
    xk2 = jax.random.normal(k5, (N2, D2), dtype=jnp.float32)
    m2 = jnp.eye(N2, dtype=jnp.float32) + 0.1 * jax.random.uniform(
        k6, (N2, N2), dtype=jnp.float32)
    loss3 = _denoise_contrastive_loss_pallas(xq2, xk2, m2, 0.1, tm=104, tn=128)
    jax.block_until_ready(loss3)
    ref3 = _reference_loss(xq2, xk2, m2, 0.1)
    assert jnp.allclose(loss3, ref3, rtol=RTOL, atol=ATOL), (loss3, ref3)

    print("KERNEL_OK")
</pallas_src>

<mosaic_0001>
module attributes {stable_mosaic.version = 11 : i64} {
  func.func @_denoise_loss_kernel(%arg0: i32, %arg1: i32, %arg2: memref<8x128xbf16, #tpu.memory_space<vmem>>, %arg3: memref<128x128xbf16, #tpu.memory_space<vmem>>, %arg4: memref<8x128xbf16, #tpu.memory_space<vmem>>, %arg5: memref<8x1xf32, #tpu.memory_space<vmem>>, %arg6: memref<1x128xf32, #tpu.memory_space<vmem>>, %arg7: memref<1x8x128xf32, #tpu.memory_space<vmem>>, %arg8: memref<8x1xf32, #tpu.memory_space<vmem>>, %arg9: memref<8x1xf32, #tpu.memory_space<vmem>>, %arg10: memref<8x1xf32, #tpu.memory_space<vmem>>) attributes {dimension_semantics = [#tpu.dimension_semantics<parallel>, #tpu.dimension_semantics<arbitrary>], iteration_bounds = array<i64: 1, 1>, scalar_prefetch = 0 : i64, scratch_operands = 3 : i64, tpu.core_type = #tpu.core_type<tc>, window_params = [{transform_indices = @transform_0, window_bounds = array<i64: 8, 128>}, {transform_indices = @transform_1, window_bounds = array<i64: 128, 128>}, {transform_indices = @transform_2, window_bounds = array<i64: 8, 128>}, {transform_indices = @transform_3, window_bounds = array<i64: 8, 1>}, {transform_indices = @transform_4, window_bounds = array<i64: 1, 128>}, {transform_indices = @transform_5, window_bounds = array<i64: 1, 8, 128>}]} {
    %c0_i32 = arith.constant 0 : i32
    %0 = arith.cmpi eq, %arg1, %c0_i32 : i32
    %1 = arith.extui %0 : i1 to i32
    %c0_i32_0 = arith.constant 0 : i32
    %2 = arith.cmpi ne, %1, %c0_i32_0 : i32
    scf.if %2 {
      %cst_26 = arith.constant 0xFF800000 : f32
      %37 = vector.broadcast %cst_26 : f32 to vector<8x1xf32>
      %c0_27 = arith.constant 0 : index
      %c0_28 = arith.constant 0 : index
      %38 = vector.load %arg8[%c0_27, %c0_28] : memref<8x1xf32, #tpu.memory_space<vmem>>, vector<8x1xf32>
      tpu.vector_store %arg8[%c0_27, %c0_28], %37 {strides = array<i32>} : memref<8x1xf32, #tpu.memory_space<vmem>>, vector<8x1xf32>,
      %cst_29 = arith.constant 0.000000e+00 : f32
      %39 = vector.broadcast %cst_29 : f32 to vector<8x1xf32>
      %c0_30 = arith.constant 0 : index
      %c0_31 = arith.constant 0 : index
      %40 = vector.load %arg9[%c0_30, %c0_31] : memref<8x1xf32, #tpu.memory_space<vmem>>, vector<8x1xf32>
      tpu.vector_store %arg9[%c0_30, %c0_31], %39 {strides = array<i32>} : memref<8x1xf32, #tpu.memory_space<vmem>>, vector<8x1xf32>,
      %cst_32 = arith.constant 0.000000e+00 : f32
      %41 = vector.broadcast %cst_32 : f32 to vector<8x1xf32>
      %c0_33 = arith.constant 0 : index
      %c0_34 = arith.constant 0 : index
      %42 = vector.load %arg10[%c0_33, %c0_34] : memref<8x1xf32, #tpu.memory_space<vmem>>, vector<8x1xf32>
      tpu.vector_store %arg10[%c0_33, %c0_34], %41 {strides = array<i32>} : memref<8x1xf32, #tpu.memory_space<vmem>>, vector<8x1xf32>,
    } else {
    }
    %c0 = arith.constant 0 : index
    %c0_1 = arith.constant 0 : index
    %3 = vector.load %arg2[%c0, %c0_1] : memref<8x128xbf16, #tpu.memory_space<vmem>>, vector<8x128xbf16>
    %c0_2 = arith.constant 0 : index
    %c0_3 = arith.constant 0 : index
    %4 = vector.load %arg3[%c0_2, %c0_3] : memref<128x128xbf16, #tpu.memory_space<vmem>>, vector<128x128xbf16>
    %c0_4 = arith.constant 0 : index
    %c0_5 = arith.constant 0 : index
    %5 = vector.load %arg4[%c0_4, %c0_5] : memref<8x128xbf16, #tpu.memory_space<vmem>>, vector<8x128xbf16>
    %cst = arith.constant dense<0.000000e+00> : vector<8x128xf32>
    %6 = tpu.matmul %3, %4, %cst {dimension_numbers = #tpu.dot_dimension_numbers<[1], [1], [0], [0], [0, 0, 1, 0], [], []>} : vector<8x128xbf16>, vector<128x128xbf16>, vector<8x128xf32> -> vector<8x128xf32>
    %c0_6 = arith.constant 0 : index
    %c0_7 = arith.constant 0 : index
    %7 = vector.load %arg6[%c0_6, %c0_7] : memref<1x128xf32, #tpu.memory_space<vmem>>, vector<1x128xf32>
    %8 = vector.broadcast %7 : vector<1x128xf32> to vector<8x128xf32>
    %9 = arith.addf %6, %8 : vector<8x128xf32>
    %c0_8 = arith.constant 0 : index
    %c0_9 = arith.constant 0 : index
    %10 = vector.load %arg8[%c0_8, %c0_9] : memref<8x1xf32, #tpu.memory_space<vmem>>, vector<8x1xf32>
    %cst_10 = arith.constant dense<0xFF800000> : vector<8xf32>
    %11 = vector.multi_reduction <maximumf>, %9, %cst_10 [1] : vector<8x128xf32> to vector<8xf32>
    %12 = vector.shape_cast %11 : vector<8xf32> to vector<8x1xf32>
    %13 = arith.maximumf %10, %12 : vector<8x1xf32>
    %14 = arith.subf %10, %13 : vector<8x1xf32>
    %15 = math.exp %14 : vector<8x1xf32>
    %c0_11 = arith.constant 0 : index
    %c0_12 = arith.constant 0 : index
    %16 = vector.load %arg9[%c0_11, %c0_12] : memref<8x1xf32, #tpu.memory_space<vmem>>, vector<8x1xf32>
    %17 = arith.mulf %15, %16 : vector<8x1xf32>
    %18 = vector.broadcast %13 : vector<8x1xf32> to vector<8x128xf32>
    %19 = arith.subf %9, %18 : vector<8x128xf32>
    %20 = math.exp %19 : vector<8x128xf32>
    %cst_13 = arith.constant dense<0.000000e+00> : vector<8xf32>
    %21 = vector.multi_reduction <add>, %20, %cst_13 [1] : vector<8x128xf32> to vector<8xf32>
    %22 = vector.shape_cast %21 : vector<8xf32> to vector<8x1xf32>
    %23 = arith.addf %17, %22 : vector<8x1xf32>
    %c0_14 = arith.constant 0 : index
    %c0_15 = arith.constant 0 : index
    %24 = vector.load %arg9[%c0_14, %c0_15] : memref<8x1xf32, #tpu.memory_space<vmem>>, vector<8x1xf32>
    tpu.vector_store %arg9[%c0_14, %c0_15], %23 {strides = array<i32>} : memref<8x1xf32, #tpu.memory_space<vmem>>, vector<8x1xf32>,
    %c0_16 = arith.constant 0 : index
    %c0_17 = arith.constant 0 : index
    %25 = vector.load %arg8[%c0_16, %c0_17] : memref<8x1xf32, #tpu.memory_space<vmem>>, vector<8x1xf32>
    tpu.vector_store %arg8[%c0_16, %c0_17], %13 {strides = array<i32>} : memref<8x1xf32, #tpu.memory_space<vmem>>, vector<8x1xf32>,
    %cst_18 = arith.constant dense<0.000000e+00> : vector<8x128xf32>
    %26 = tpu.matmul %5, %4, %cst_18 {dimension_numbers = #tpu.dot_dimension_numbers<[1], [0], [0], [1], [0, 0, 1, 1], [], []>} : vector<8x128xbf16>, vector<128x128xbf16>, vector<8x128xf32> -> vector<8x128xf32>
    %c0_19 = arith.constant 0 : index
    %c0_20 = arith.constant 0 : index
    %27 = vector.load %arg10[%c0_19, %c0_20] : memref<8x1xf32, #tpu.memory_space<vmem>>, vector<8x1xf32>
    %28 = arith.extf %3 : vector<8x128xbf16> to vector<8x128xf32>
    %29 = arith.mulf %28, %26 : vector<8x128xf32>
    %cst_21 = arith.constant dense<0.000000e+00> : vector<8xf32>
    %30 = vector.multi_reduction <add>, %29, %cst_21 [1] : vector<8x128xf32> to vector<8xf32>
    %31 = vector.shape_cast %30 : vector<8xf32> to vector<8x1xf32>
    %32 = arith.addf %27, %31 : vector<8x1xf32>
    %c0_22 = arith.constant 0 : index
    %c0_23 = arith.constant 0 : index
    %33 = vector.load %arg10[%c0_22, %c0_23] : memref<8x1xf32, #tpu.memory_space<vmem>>, vector<8x1xf32>
    tpu.vector_store %arg10[%c0_22, %c0_23], %32 {strides = array<i32>} : memref<8x1xf32, #tpu.memory_space<vmem>>, vector<8x1xf32>,
    %c0_i32_24 = arith.constant 0 : i32
    %34 = arith.cmpi eq, %arg1, %c0_i32_24 : i32
    %35 = arith.extui %34 : i1 to i32
    %c0_i32_25 = arith.constant 0 : i32
    %36 = arith.cmpi ne, %35, %c0_i32_25 : i32
    scf.if %36 {
      %c0_26 = arith.constant 0 : index
      %c0_27 = arith.constant 0 : index
      %37 = vector.load %arg8[%c0_26, %c0_27] : memref<8x1xf32, #tpu.memory_space<vmem>>, vector<8x1xf32>
      %c0_28 = arith.constant 0 : index
      %c0_29 = arith.constant 0 : index
      %38 = vector.load %arg9[%c0_28, %c0_29] : memref<8x1xf32, #tpu.memory_space<vmem>>, vector<8x1xf32>
      %39 = math.log %38 : vector<8x1xf32>
      %40 = arith.addf %37, %39 : vector<8x1xf32>
      %c0_30 = arith.constant 0 : index
      %c0_31 = arith.constant 0 : index
      %41 = vector.load %arg5[%c0_30, %c0_31] : memref<8x1xf32, #tpu.memory_space<vmem>>, vector<8x1xf32>
      %cst_32 = arith.constant 1.000000e-07 : f32
      %42 = vector.broadcast %cst_32 : f32 to vector<8x1xf32>
      %43 = arith.maximumf %41, %42 : vector<8x1xf32>
      %44 = arith.mulf %40, %41 : vector<8x1xf32>
      %c0_33 = arith.constant 0 : index
      %c0_34 = arith.constant 0 : index
      %45 = vector.load %arg10[%c0_33, %c0_34] : memref<8x1xf32, #tpu.memory_space<vmem>>, vector<8x1xf32>
      %46 = arith.subf %44, %45 : vector<8x1xf32>
      %47 = arith.divf %46, %43 : vector<8x1xf32>
      %48 = vector.shape_cast %47 : vector<8x1xf32> to vector<1x8x1xf32>
      %cst_35 = arith.constant dense<0.000000e+00> : vector<1xf32>
      %49 = vector.multi_reduction <add>, %48, %cst_35 [1, 2] : vector<1x8x1xf32> to vector<1xf32>
      %50 = vector.shape_cast %49 : vector<1xf32> to vector<1x1x1xf32>
      %51 = vector.extract %50[0, 0, 0] : f32 from vector<1x1x1xf32>
      %52 = vector.broadcast %51 : f32 to vector<1x8x128xf32>
      %c0_36 = arith.constant 0 : index
      %c0_37 = arith.constant 0 : index
      %c0_38 = arith.constant 0 : index
      %53 = vector.load %arg7[%c0_36, %c0_37, %c0_38] : memref<1x8x128xf32, #tpu.memory_space<vmem>>, vector<1x8x128xf32>
      tpu.vector_store %arg7[%c0_36, %c0_37, %c0_38], %52 {strides = array<i32>} : memref<1x8x128xf32, #tpu.memory_space<vmem>>, vector<1x8x128xf32>,
    } else {
    }
    return
  }
  func.func @transform_0(%arg0: i32, %arg1: i32) -> (i32, i32) {
    %c0_i32 = arith.constant 0 : i32
    %c0_i32_0 = arith.constant 0 : i32
    return %arg0, %c0_i32 : i32, i32
  }
  func.func @transform_1(%arg0: i32, %arg1: i32) -> (i32, i32) {
    %c0_i32 = arith.constant 0 : i32
    %c0_i32_0 = arith.constant 0 : i32
    return %arg1, %c0_i32 : i32, i32
  }
  func.func @transform_2(%arg0: i32, %arg1: i32) -> (i32, i32) {
    %c0_i32 = arith.constant 0 : i32
    return %arg0, %arg1 : i32, i32
  }
  func.func @transform_3(%arg0: i32, %arg1: i32) -> (i32, i32) {
    %c0_i32 = arith.constant 0 : i32
    %c0_i32_0 = arith.constant 0 : i32
    return %arg0, %c0_i32 : i32, i32
  }
  func.func @transform_4(%arg0: i32, %arg1: i32) -> (i32, i32) {
    %c0_i32 = arith.constant 0 : i32
    %c0_i32_0 = arith.constant 0 : i32
    return %c0_i32, %arg1 : i32, i32
  }
  func.func @transform_5(%arg0: i32, %arg1: i32) -> (i32, i32, i32) {
    %c0_i32 = arith.constant 0 : i32
    %c0_i32_0 = arith.constant 0 : i32
    %c0_i32_1 = arith.constant 0 : i32
    return %arg0, %c0_i32, %c0_i32_0 : i32, i32, i32
  }
}

</mosaic_0001>

<llo_original>
// kernel: tpu_custom_call.1
$region0: #{tpu_custom_call.1}
  #allocation0 [shape = 'u32[]', space=smem, size = 0x4, offset = 0x4, fixed_abs, tag = 'smem constant byte address 0x4 - core index']
  #allocation1 [shape = 'u32[144,128]{1,0:T(1,128)}', space=vmem, size = 0x12000, scoped, tag = 'internal scratch']
  #allocation2 [shape = 'f32[8,1]{1,0:T(8,128)}', space=vmem, size = 0x1000, scoped, tag = 'scratch operand']
  #allocation3 [shape = 'f32[8,1]{1,0:T(8,128)}', space=vmem, size = 0x1000, scoped, tag = 'scratch operand']
  #allocation4 [shape = 'f32[8,1]{1,0:T(8,128)}', space=vmem, size = 0x1000, scoped, tag = 'scratch operand']
  %s0 = inlined_call_operand.vmem [shape: bf16[8,128], index: 0, kind: input, shape index: {}]
  %s1 = inlined_call_operand.hbm [shape: bf16[128,128], index: 1, kind: input, shape index: {}]
  %s2 = inlined_call_operand.vmem [shape: bf16[8,128], index: 2, kind: input, shape index: {}]
  %s3 = inlined_call_operand.vmem [shape: f32[8,1], index: 3, kind: input, shape index: {}]
  %s4 = inlined_call_operand.vmem [shape: f32[1,128], index: 4, kind: input, shape index: {}]
  %s5 = inlined_call_operand.hbm [shape: f32[1,8,128], index: 5, kind: output, shape index: {}]
  %s6 = sld [smem:[#allocation0]]
  $region42: #{tpu_custom_call.1} parent=0
    _
  %s8 = ssub.s32 1, %s6
  %s9 = scalar_select 0, %s8, %s6
  $region1: #{tpu_custom_call.1} parent=0
    #allocation5 [shape = 'u8[32768]{0}', space=vmem, size = 0x8000, scoped, tag = 'input window, operand 1, single buffered']
    #allocation6 [shape = 's32[1]{0}', space=sflag, size = 0x4, scoped, tag = 'scoped memory for tpu_custom_call.1']
    #allocation7 [shape = 's32[1]{0}', space=sflag, size = 0x4, scoped, tag = 'scoped memory for tpu_custom_call.1']
    #allocation8 [shape = 'u8[4096]{0}', space=vmem, size = 0x1000, scoped, tag = 'output window, operand 0, single buffered']
    %10 = vsyncpa [#allocation6], 0
    %11 = vsyncpa [#allocation7], 0
    // Predicated region
    $region2: #{tpu_custom_call.1} parent=1 // pred_check
      _
    $region3: #{tpu_custom_call.1} parent=1 // pred_check_branch
      %13 = sbr.rel (0) target = $region5
    $region4: #{tpu_custom_call.1} parent=1 // pred_region
      _
    $region5: #{tpu_custom_call.1} parent=1 // pred_fallthru
      _
    // Predicated region
    $region6: #{tpu_custom_call.1} parent=1 // pred_check
      _
    $region7: #{tpu_custom_call.1} parent=1 // pred_check_branch
      %15 = sbr.rel (0) target = $region9
    $region8: #{tpu_custom_call.1} parent=1 // pred_region
      %s17 = ssub.s32 1024, 1024
      %18 = vsyncadd [#allocation6], %s17
      %s19 = sshll.u32 [#allocation5], 4
      %s20 = int_to_ptr.vmem [resolvable:$true] %s19
      %25 = dma.hbm_to_vmem [thread:$0]  %s1, 1024, %s20, [#allocation6], 64, 64, 4
    $region9: #{tpu_custom_call.1} parent=1 // pred_fallthru
      _
    // Predicated region
    $region10: #{tpu_custom_call.1} parent=1 // pred_check
      _
    $region11: #{tpu_custom_call.1} parent=1 // pred_check_branch
      %27 = sbr.rel (0) target = $region13
    $region12: #{tpu_custom_call.1} parent=1 // pred_region
      _
    $region13: #{tpu_custom_call.1} parent=1 // pred_fallthru
      _
    // Predicated region
    $region14: #{tpu_custom_call.1} parent=1 // pred_check
      _
    $region15: #{tpu_custom_call.1} parent=1 // pred_check_branch
      %29 = sbr.rel (0) target = $region17
    $region16: #{tpu_custom_call.1} parent=1 // pred_region
      _
    $region17: #{tpu_custom_call.1} parent=1 // pred_fallthru
      _
    // Predicated region
    $region18: #{tpu_custom_call.1} parent=1 // pred_check
      _
    $region19: #{tpu_custom_call.1} parent=1 // pred_check_branch
      %31 = sbr.rel (0) target = $region21
    $region20: #{tpu_custom_call.1} parent=1 // pred_region
      _
    $region21: #{tpu_custom_call.1} parent=1 // pred_fallthru
      _
    // Predicated region
    $region22: #{tpu_custom_call.1} parent=1 // pred_check
      _
    $region23: #{tpu_custom_call.1} parent=1 // pred_check_branch
      %33 = sbr.rel (0) target = $region25
    $region24: #{tpu_custom_call.1} parent=1 // pred_region
      %34 = dma.done [#allocation6], 1024
    $region25: #{tpu_custom_call.1} parent=1 // pred_fallthru
      _
    %p36 = scmp.eq.s32.totalorder 0, 0
    // Predicated region
    $region26: #{tpu_custom_call.1} parent=1 // pred_check
      %p37 = pneg %p36
    $region27: #{tpu_custom_call.1} parent=1 // pred_check_branch
      %39 = sbr.rel (%p37) target = $region29
    $region28: #{tpu_custom_call.1} parent=1 // pred_region
      %vm40 = vcmask 7168
      %41 = vst.msk [vmem:[#allocation2] sm:$0xff] %vm40, -inf
      %42 = vst.msk [vmem:[#allocation3] sm:$0xff] %vm40, 0.0
      %43 = vst.msk [vmem:[#allocation4] sm:$0xff] %vm40, 0.0
    $region29: #{tpu_custom_call.1} parent=1 // pred_fallthru
      _
    %v44 = vld [vmem:[%s0] sm:$0xf]
    %v45 = vld [vmem:[#allocation5] sm:$0xf]
    %v46 = vld [vmem:[#allocation5 + $0x4] sm:$0xf]
    %v47 = vld [vmem:[#allocation5 + $0x8] sm:$0xf]
    %v48 = vld [vmem:[#allocation5 + $0xc] sm:$0xf]
    %v49 = vld [vmem:[#allocation5 + $0x10] sm:$0xf]
    %v50 = vld [vmem:[#allocation5 + $0x14] sm:$0xf]
    %v51 = vld [vmem:[#allocation5 + $0x18] sm:$0xf]
    %v52 = vld [vmem:[#allocation5 + $0x1c] sm:$0xf]
    %v53 = vld [vmem:[#allocation5 + $0x20] sm:$0xf]
    %v54 = vld [vmem:[#allocation5 + $0x24] sm:$0xf]
    %v55 = vld [vmem:[#allocation5 + $0x28] sm:$0xf]
    %v56 = vld [vmem:[#allocation5 + $0x2c] sm:$0xf]
    %v57 = vld [vmem:[#allocation5 + $0x30] sm:$0xf]
    %v58 = vld [vmem:[#allocation5 + $0x34] sm:$0xf]
    %v59 = vld [vmem:[#allocation5 + $0x38] sm:$0xf]
    %v60 = vld [vmem:[#allocation5 + $0x3c] sm:$0xf]
    %v61 = vld [vmem:[%s2] sm:$0xf]
    %v62 = vld [vmem:[%s4] sm:$0x1]
    %v64 = vlaneseq
    %v65 = vshrl.u32 %v64, 7
    %v66 = vsub.s32 0, %v65
    %v67 = vrot.slane %v62, %v66
    %v85 = vunpack.c.l.b16 %v45
    %v86 = vunpack.c.l.b16 %v46
    %v87 = vunpack.c.l.b16 %v47
    %v88 = vunpack.c.l.b16 %v48
    %v89 = vunpack.c.l.b16 %v49
    %v90 = vunpack.c.l.b16 %v50
    %v91 = vunpack.c.l.b16 %v51
    %v92 = vunpack.c.l.b16 %v52
    %v93 = vunpack.c.l.b16 %v53
    %v94 = vunpack.c.l.b16 %v54
    %v95 = vunpack.c.l.b16 %v55
    %v96 = vunpack.c.l.b16 %v56
    %v97 = vunpack.c.l.b16 %v57
    %v98 = vunpack.c.l.b16 %v58
    %v99 = vunpack.c.l.b16 %v59
    %v100 = vunpack.c.l.b16 %v60
    %v101 = vpack.c.b16 %v86, %v85
    %v102 = vpack.c.b16 %v88, %v87
    %v103 = vpack.c.b16 %v90, %v89
    %v104 = vpack.c.b16 %v92, %v91
    %v105 = vpack.c.b16 %v94, %v93
    %v106 = vpack.c.b16 %v96, %v95
    %v107 = vpack.c.b16 %v98, %v97
    %v108 = vpack.c.b16 %v100, %v99
    %117 = vmatprep.subr.bf16.mxu0 0
    %118 = vmatpush1.bf16.xpose.msra.mxu0 %v101
    %119 = vmatprep.subr.bf16.mxu0 0
    %120 = vmatpush1.bf16.xpose.msra.mxu0 %v102
    %121 = vmatprep.subr.bf16.mxu0 0
    %122 = vmatpush1.bf16.xpose.msra.mxu0 %v103
    %123 = vmatprep.subr.bf16.mxu0 0
    %124 = vmatpush1.bf16.xpose.msra.mxu0 %v104
    %125 = vmatprep.subr.bf16.mxu0 0
    %126 = vmatpush1.bf16.xpose.msra.mxu0 %v105
    %127 = vmatprep.subr.bf16.mxu0 0
    %128 = vmatpush1.bf16.xpose.msra.mxu0 %v106
    %129 = vmatprep.subr.bf16.mxu0 0
    %130 = vmatpush1.bf16.xpose.msra.mxu0 %v107
    %131 = vmatprep.subr.bf16.mxu0 0
    %132 = vmatpush1.bf16.xpose.msra.mxu0 %v108
    %133 = vmatprep.subr.bf16.mxu0 0
    %134 = vmatpush1.bf16.xpose.msra.mxu0 0
    %135 = vmatprep.subr.bf16.mxu0 0
    %136 = vmatpush1.bf16.xpose.msra.mxu0 0
    %137 = vmatprep.subr.bf16.mxu0 0
    %138 = vmatpush1.bf16.xpose.msra.mxu0 0
    %139 = vmatprep.subr.bf16.mxu0 0
    %140 = vmatpush1.bf16.xpose.msra.mxu0 0
    %141 = vmatprep.subr.bf16.mxu0 0
    %142 = vmatpush1.bf16.xpose.msra.mxu0 0
    %143 = vmatprep.subr.bf16.mxu0 0
    %144 = vmatpush1.bf16.xpose.msra.mxu0 0
    %145 = vmatprep.subr.bf16.mxu0 0
    %146 = vmatpush1.bf16.xpose.msra.mxu0 0
    %147 = vmatprep.subr.bf16.mxu0 0
    %148 = vmatpush1.bf16.xpose.msra.mxu0 0
    %149 = vmatprep.mubr.bf16.mxu0 0
    %150 = vmatmul.mubr.bf16.gmra.mrb[0].mxu0 %v44
    %v151 = vpop.f32.mrb[0].mxu0
    %v152 = vadd.f32 %v67, %v151
    %v153 = vpop.f32.mrb[0].mxu0
    %v154 = vpop.f32.mrb[0].mxu0
    %v155 = vpop.f32.mrb[0].mxu0
    %156 = vdwg.mxu0
    %v157 = vld [vmem:[#allocation2] sm:$0xff]
    %158 = vmax.xlane.f32.xlu0 %v152
    %v159 = vpop.xlane.xlu0 %158
    %v160 = vmax.f32 %v157, %v159
    %v161 = vsub.f32 %v157, %v160
    %v162 = vmul.f32 %v161, 1.442695
    %v163 = vpow.pop %v162
    %v164 = vld [vmem:[#allocation3] sm:$0xff]
    %v165 = vmul.f32 %v163, %v164
    %167 = vset.pattern.permute.xlu0 0
    %168 = vperm.xlu0 %167, %v160
    %v169 = vpop.permute.xlu0 %168
    %v171 = vsub.f32 %v152, %v169
    %v172 = vmul.f32 %v171, 1.442695
    %v173 = vpow.pop %v172
    %174 = vadd.xlane.f32.xlu0 %v173
    %v175 = vpop.xlane.xlu0 %174
    %v176 = vadd.f32 %v165, %v175
    %vm177 = vcmask 7168
    %178 = vst.msk [vmem:[#allocation3] sm:$0xff] %vm177, %v176
    %179 = vst.msk [vmem:[#allocation2] sm:$0xff] %vm177, %v160
    %180 = vmatprep.subr.bf16.mxu0 0
    %181 = vmatpush1.bf16.msra.mxu0 %v101
    %182 = vmatprep.subr.bf16.mxu0 0
    %183 = vmatpush1.bf16.msra.mxu0 %v102
    %184 = vmatprep.subr.bf16.mxu0 0
    %185 = vmatpush1.bf16.msra.mxu0 %v103
    %186 = vmatprep.subr.bf16.mxu0 0
    %187 = vmatpush1.bf16.msra.mxu0 %v104
    %188 = vmatprep.subr.bf16.mxu0 0
    %189 = vmatpush1.bf16.msra.mxu0 %v105
    %190 = vmatprep.subr.bf16.mxu0 0
    %191 = vmatpush1.bf16.msra.mxu0 %v106
    %192 = vmatprep.subr.bf16.mxu0 0
    %193 = vmatpush1.bf16.msra.mxu0 %v107
    %194 = vmatprep.subr.bf16.mxu0 0
    %195 = vmatpush1.bf16.msra.mxu0 %v108
    %196 = vmatprep.subr.bf16.mxu0 0
    %197 = vmatpush1.bf16.msra.mxu0 0
    %198 = vmatprep.subr.bf16.mxu0 0
    %199 = vmatpush1.bf16.msra.mxu0 0
    %200 = vmatprep.subr.bf16.mxu0 0
    %201 = vmatpush1.bf16.msra.mxu0 0
    %202 = vmatprep.subr.bf16.mxu0 0
    %203 = vmatpush1.bf16.msra.mxu0 0
    %204 = vmatprep.subr.bf16.mxu0 0
    %205 = vmatpush1.bf16.msra.mxu0 0
    %206 = vmatprep.subr.bf16.mxu0 0
    %207 = vmatpush1.bf16.msra.mxu0 0
    %208 = vmatprep.subr.bf16.mxu0 0
    %209 = vmatpush1.bf16.msra.mxu0 0
    %210 = vmatprep.subr.bf16.mxu0 0
    %211 = vmatpush1.bf16.msra.mxu0 0
    %212 = vmatprep.mubr.bf16.mxu0 0
    %213 = vmatmul.mubr.bf16.gmra.mrb[0].mxu0 %v61
    %v214 = vpop.f32.mrb[0].mxu0
    %v215 = vadd.f32 0.0, %v214
    %v216 = vpop.f32.mrb[0].mxu0
    %v217 = vpop.f32.mrb[0].mxu0
    %v218 = vpop.f32.mrb[0].mxu0
    %219 = vdwg.mxu0
    %v220 = vld [vmem:[#allocation4] sm:$0xff]
    %v221 = vunpack.c.l.bf16 %v44
    %v222 = vmul.f32 %v221, %v215
    %223 = vadd.xlane.f32.xlu0 %v222
    %v224 = vpop.xlane.xlu0 %223
    %v225 = vadd.f32 %v220, %v224
    %226 = vst.msk [vmem:[#allocation4] sm:$0xff] %vm177, %v225
    // Predicated region
    $region30: #{tpu_custom_call.1} parent=1 // pred_check
      %p227 = pneg %p36
    $region31: #{tpu_custom_call.1} parent=1 // pred_check_branch
      %229 = sbr.rel (%p227) target = $region33
    $region32: #{tpu_custom_call.1} parent=1 // pred_region
      %v230 = vld [vmem:[#allocation2] sm:$0xff]
      %v231 = vld [vmem:[#allocation3] sm:$0xff]
      %v232 = vlog2.pop %v231
      %v233 = vmul.f32 %v232, 0.6931472
      %v234 = vadd.f32 %v230, %v233
      %v235 = vld [vmem:[%s3] sm:$0xff]
      %v236 = vmax.f32 %v235, 1e-07
      %v237 = vmul.f32 %v234, %v235
      %v238 = vld [vmem:[#allocation4] sm:$0xff]
      %v239 = vsub.f32 %v237, %v238
      %v240 = vrcp.pop %v236
      %v241 = vmul.f32 %v239, %v240
      %v242 = vsel %vm177, %v241, 0.0
      %243 = vadd.xlane.f32.xlu0 %v242
      %v244 = vpop.xlane.xlu0 %243
      %v245 = vrot.slane %v244, 4
      %v246 = vadd.f32 %v244, %v245
      %v247 = vrot.slane %v246, 2
      %v248 = vadd.f32 %v246, %v247
      %v249 = vrot.slane %v248, 1
      %v250 = vadd.f32 %v248, %v249
      %s251 = vtos %v250
      %v252 = vstv %s251
      %253 = vst [vmem:[#allocation8] sm:$0xff] %v252
    $region33: #{tpu_custom_call.1} parent=1 // pred_fallthru
      _
    // Predicated region
    $region34: #{tpu_custom_call.1} parent=1 // pred_check
      _
    $region35: #{tpu_custom_call.1} parent=1 // pred_check_branch
      %255 = sbr.rel (0) target = $region37
    $region36: #{tpu_custom_call.1} parent=1 // pred_region
      %s257 = ssub.s32 128, 128
      %258 = vsyncadd [#allocation7], %s257
      %s260 = sshll.u32 [#allocation8], 4
      %s261 = int_to_ptr.vmem [resolvable:$true] %s260
      %263 = dma.vmem_to_hbm [thread:$0]  %s261, 128, %s5, [#allocation7]
    $region37: #{tpu_custom_call.1} parent=1 // pred_fallthru
      _
    // Predicated region
    $region38: #{tpu_custom_call.1} parent=1 // pred_check
      _
    $region39: #{tpu_custom_call.1} parent=1 // pred_check_branch
      %265 = sbr.rel (0) target = $region41
    $region40: #{tpu_custom_call.1} parent=1 // pred_region
      %266 = dma.done [#allocation7], 128
    $region41: #{tpu_custom_call.1} parent=1 // pred_fallthru
      _
    %267 = vsyncpa [#allocation6], 1
    %268 = vsyncpa [#allocation7], 1

</llo_original>
